<compile_context>
chip_gen: v6e
topology: v6e:2x2x1
jax: 0.10.0
libtpu: 0.0.40
codegen_flags: <defaults>
</compile_context>

<pallas_src>
import jax
import jax.numpy as jnp
from jax.experimental import pallas as pl
from jax.experimental.pallas import tpu as pltpu


def _make_clamp_kernel(lo_v, hi_v, compute_in_f32):
    def kernel(x_ref, o_ref):
        x = x_ref[...]
        if compute_in_f32:
            # fp8 path: 255 is not exactly representable; clamp in f32, cast back.
            y = jnp.clip(x.astype(jnp.float32),
                         jnp.asarray(lo_v, jnp.float32),
                         jnp.asarray(hi_v, jnp.float32))
            o_ref[...] = y.astype(o_ref.dtype)
        else:
            lo = jnp.asarray(lo_v, x.dtype)
            hi = jnp.asarray(hi_v, x.dtype)
            o_ref[...] = jnp.clip(x, lo, hi)
    return kernel


def relu255(x: jax.Array, *, target_block_bytes: int = 4 * 1024 * 1024) -> jax.Array:
    """clamp(x, 0, 255), same shape/dtype as input. Works for any shape."""
    dtype = x.dtype
    if x.size == 0:
        return x

    # ---- dtype handling / identity short-circuits (no kernel launch) ----------
    if dtype == jnp.bool_:
        return x                                    # values in {0,1} subset of [0,255]
    compute_in_f32 = False
    if jnp.issubdtype(dtype, jnp.integer):
        info = jnp.iinfo(dtype)
        if info.min >= 0 and info.max <= 255:       # e.g. uint8: clamp is identity
            return x
        lo_v, hi_v = max(0, int(info.min)), min(255, int(info.max))
    elif jnp.issubdtype(dtype, jnp.floating):
        lo_v, hi_v = 0.0, 255.0
        compute_in_f32 = jnp.dtype(dtype).itemsize < 2   # fp8
    else:
        # Exotic dtypes (complex, ...) — torch.clamp would not accept these either.
        return jnp.clip(x, 0, 255)

    if x.ndim == 0:
        return jnp.clip(x, jnp.asarray(lo_v, dtype), jnp.asarray(hi_v, dtype))

    itemsize = jnp.dtype(dtype).itemsize
    sublane = max(8, 32 // itemsize)                # 8 / 16 / 32 for 32/16/8-bit

    # ---- layout-preserving 2D view: collapse leading dims, last dim on lanes --
    if x.ndim == 1:
        x2d = x.reshape(1, x.shape[0])
    else:
        x2d = x.reshape(-1, x.shape[-1])
    rows, cols = x2d.shape

    # ---- lane tiling -----------------------------------------------------------
    if cols % 128 == 0:
        # Lane-aligned last dim: wide unmasked stores, chunk it if it is huge.
        max_lane = max(128, (target_block_bytes // (sublane * itemsize)) // 128 * 128)
        lane_tile = min(cols, max_lane)
    else:
        # Misaligned last dim: take the whole dim as one block ("block dim equals
        # full array dim" escape hatch). The HBM layout is already lane-padded, so
        # this costs no extra relayout — unlike flattening to a new lane mapping.
        lane_tile = cols
        if lane_tile * sublane * itemsize > 8 * 1024 * 1024:
            # TODO(synk): enormous misaligned last dim — tile lanes in-kernel with
            # a masked edge instead of falling back to XLA.
            return jnp.clip(x, jnp.asarray(lo_v, dtype), jnp.asarray(hi_v, dtype))
    lanes_grid = pl.cdiv(cols, lane_tile)

    # ---- row tiling: ~target_block_bytes per block -----------------------------
    max_rows_per_block = max(1, target_block_bytes // (lane_tile * itemsize))
    if max_rows_per_block >= rows:
        tile_rows = rows                    # single row-block (full dim: any size legal)
    else:
        tile_rows = max(sublane, (max_rows_per_block // sublane) * sublane)

    # Only force extra grid steps on chips with 2 TensorCores (v7x); on single-TC
    # v5e/v6e the split would just shrink the block and add per-step overhead.
    try:
        kind = jax.devices()[0].device_kind.lower()
    except Exception:
        kind = ""
    min_steps = 4 if "v7" in kind else 1
    # TODO(synk): if an xprof trace shows one v7x TensorCore idle, switch the row
    # axis to pltpu.CORE_PARALLEL (or pl.core_map over a tensorcore mesh).
    while pl.cdiv(rows, tile_rows) * lanes_grid < min_steps and tile_rows > sublane:
        tile_rows = max(sublane, ((tile_rows // 2) // sublane) * sublane)

    grid = (pl.cdiv(rows, tile_rows), lanes_grid)

    out = pl.pallas_call(
        _make_clamp_kernel(lo_v, hi_v, compute_in_f32),
        out_shape=jax.ShapeDtypeStruct((rows, cols), dtype),
        grid_spec=pltpu.PrefetchScalarGridSpec(
            num_scalar_prefetch=0,
            grid=grid,
            in_specs=[pl.BlockSpec((tile_rows, lane_tile), lambda i, j: (i, j))],
            out_specs=pl.BlockSpec((tile_rows, lane_tile), lambda i, j: (i, j)),
        ),
        compiler_params=pltpu.CompilerParams(
            dimension_semantics=("parallel", "parallel"),
            # 2 arrays x 2 buffers x ~4 MiB block = 16 MiB resident; 32 MiB scoped
            # limit is safe on every generation (v7x physical VMEM is 64 MiB).
            vmem_limit_bytes=32 * 1024 * 1024,
        ),
    )(x2d)

    return out.reshape(x.shape)


if __name__ == "__main__":
    key = jax.random.PRNGKey(0)

    # NCHW input, values spanning below 0 and above 255 to exercise both clamps.
    x = jax.random.uniform(key, (2, 4, 16, 16), dtype=jnp.float32,
                           minval=-100.0, maxval=400.0)
    y = jax.block_until_ready(relu255(x))
    ref = jnp.clip(x, 0.0, 255.0)
    assert y.shape == x.shape and y.dtype == x.dtype
    assert jnp.allclose(y, ref), "mismatch vs reference clamp (f32 NCHW)"

    # Lane-aligned path (last dim multiple of 128), bf16.
    x2 = jax.random.uniform(jax.random.PRNGKey(0), (2, 8, 256), dtype=jnp.bfloat16,
                            minval=-100.0, maxval=400.0)
    y2 = jax.block_until_ready(relu255(x2))
    ref2 = jnp.clip(x2, 0, 255)
    assert y2.shape == x2.shape and y2.dtype == x2.dtype
    assert jnp.array_equal(y2, ref2), "mismatch vs reference clamp (bf16 aligned)"

    # uint8 identity short-circuit.
    x3 = jnp.arange(256, dtype=jnp.uint8).reshape(2, 128)
    y3 = jax.block_until_ready(relu255(x3))
    assert jnp.array_equal(y3, x3)

    print("KERNEL_OK")
</pallas_src>

<mosaic_0001>
module attributes {stable_mosaic.version = 11 : i64} {
  func.func @kernel(%arg0: i32, %arg1: i32, %arg2: memref<128x16xf32, #tpu.memory_space<vmem>>, %arg3: memref<128x16xf32, #tpu.memory_space<vmem>>) attributes {dimension_semantics = [#tpu.dimension_semantics<parallel>, #tpu.dimension_semantics<parallel>], iteration_bounds = array<i64: 1, 1>, scalar_prefetch = 0 : i64, scratch_operands = 0 : i64, tpu.core_type = #tpu.core_type<tc>, window_params = [{transform_indices = @transform_0, window_bounds = array<i64: 128, 16>}, {transform_indices = @transform_1, window_bounds = array<i64: 128, 16>}]} {
    %c0 = arith.constant 0 : index
    %c0_0 = arith.constant 0 : index
    %0 = vector.load %arg2[%c0, %c0_0] : memref<128x16xf32, #tpu.memory_space<vmem>>, vector<128x16xf32>
    %cst = arith.constant 0.000000e+00 : f32
    %cst_1 = arith.constant 2.550000e+02 : f32
    %1 = vector.broadcast %cst : f32 to vector<128x16xf32>
    %2 = arith.maximumf %1, %0 : vector<128x16xf32>
    %3 = vector.broadcast %cst_1 : f32 to vector<128x16xf32>
    %4 = arith.minimumf %3, %2 : vector<128x16xf32>
    %c0_2 = arith.constant 0 : index
    %c0_3 = arith.constant 0 : index
    %5 = vector.load %arg3[%c0_2, %c0_3] : memref<128x16xf32, #tpu.memory_space<vmem>>, vector<128x16xf32>
    tpu.vector_store %arg3[%c0_2, %c0_3], %4 {strides = array<i32>} : memref<128x16xf32, #tpu.memory_space<vmem>>, vector<128x16xf32>,
    return
  }
  func.func @transform_0(%arg0: i32, %arg1: i32) -> (i32, i32) {
    %c0_i32 = arith.constant 0 : i32
    return %arg0, %arg1 : i32, i32
  }
  func.func @transform_1(%arg0: i32, %arg1: i32) -> (i32, i32) {
    %c0_i32 = arith.constant 0 : i32
    return %arg0, %arg1 : i32, i32
  }
}

</mosaic_0001>

<llo_original>
// kernel: tpu_custom_call.1
$region0: #{tpu_custom_call.1}
  #allocation0 [shape = 'u32[]', space=smem, size = 0x4, offset = 0x4, fixed_abs, tag = 'smem constant byte address 0x4 - core index']
  #allocation1 [shape = 'u32[144,128]{1,0:T(1,128)}', space=vmem, size = 0x12000, scoped, tag = 'internal scratch']
  %s0 = inlined_call_operand.vmem [shape: f32[128,16], index: 0, kind: input, shape index: {}]
  %s1 = inlined_call_operand.vmem [shape: f32[128,16], index: 1, kind: output, shape index: {}]
  %s2 = sld [smem:[#allocation0]]
  $region14: #{tpu_custom_call.1} parent=0
    _
  %s4 = ssub.s32 1, %s2
  %s5 = scalar_select 0, %s4, %s2
  // Predicated region
  $region2: #{tpu_custom_call.1} parent=0 // pred_check
    _
  $region3: #{tpu_custom_call.1} parent=0 // pred_check_branch
    %7 = sbr.rel (0) target = $region5
  $region4: #{tpu_custom_call.1} parent=0 // pred_region
    _
  $region5: #{tpu_custom_call.1} parent=0 // pred_fallthru
    _
  %v8 = vld [vmem:[%s0] sm:$0xff]
  %v9 = vld [vmem:[%s0 + $0x8] sm:$0xff]
  %v10 = vld [vmem:[%s0 + $0x10] sm:$0xff]
  %v11 = vld [vmem:[%s0 + $0x18] sm:$0xff]
  %v12 = vld [vmem:[%s0 + $0x20] sm:$0xff]
  %v13 = vld [vmem:[%s0 + $0x28] sm:$0xff]
  %v14 = vld [vmem:[%s0 + $0x30] sm:$0xff]
  %v15 = vld [vmem:[%s0 + $0x38] sm:$0xff]
  %v16 = vld [vmem:[%s0 + $0x40] sm:$0xff]
  %v17 = vld [vmem:[%s0 + $0x48] sm:$0xff]
  %v18 = vld [vmem:[%s0 + $0x50] sm:$0xff]
  %v19 = vld [vmem:[%s0 + $0x58] sm:$0xff]
  %v20 = vld [vmem:[%s0 + $0x60] sm:$0xff]
  %v21 = vld [vmem:[%s0 + $0x68] sm:$0xff]
  %v22 = vld [vmem:[%s0 + $0x70] sm:$0xff]
  %v23 = vld [vmem:[%s0 + $0x78] sm:$0xff]
  %v24 = vmax.f32 %v8, 0.0
  %v25 = vmax.f32 %v9, 0.0
  %v26 = vmax.f32 %v10, 0.0
  %v27 = vmax.f32 %v11, 0.0
  %v28 = vmax.f32 %v12, 0.0
  %v29 = vmax.f32 %v13, 0.0
  %v30 = vmax.f32 %v14, 0.0
  %v31 = vmax.f32 %v15, 0.0
  %v32 = vmax.f32 %v16, 0.0
  %v33 = vmax.f32 %v17, 0.0
  %v34 = vmax.f32 %v18, 0.0
  %v35 = vmax.f32 %v19, 0.0
  %v36 = vmax.f32 %v20, 0.0
  %v37 = vmax.f32 %v21, 0.0
  %v38 = vmax.f32 %v22, 0.0
  %v39 = vmax.f32 %v23, 0.0
  %v40 = vmin.f32 %v24, 255.0
  %v41 = vmin.f32 %v25, 255.0
  %v42 = vmin.f32 %v26, 255.0
  %v43 = vmin.f32 %v27, 255.0
  %v44 = vmin.f32 %v28, 255.0
  %v45 = vmin.f32 %v29, 255.0
  %v46 = vmin.f32 %v30, 255.0
  %v47 = vmin.f32 %v31, 255.0
  %v48 = vmin.f32 %v32, 255.0
  %v49 = vmin.f32 %v33, 255.0
  %v50 = vmin.f32 %v34, 255.0
  %v51 = vmin.f32 %v35, 255.0
  %v52 = vmin.f32 %v36, 255.0
  %v53 = vmin.f32 %v37, 255.0
  %v54 = vmin.f32 %v38, 255.0
  %v55 = vmin.f32 %v39, 255.0
  %vm56 = vcmask 130048
  %57 = vst.msk [vmem:[%s1] sm:$0xff] %vm56, %v40
  %58 = vst.msk [vmem:[%s1 + $0x8] sm:$0xff] %vm56, %v41
  %59 = vst.msk [vmem:[%s1 + $0x10] sm:$0xff] %vm56, %v42
  %60 = vst.msk [vmem:[%s1 + $0x18] sm:$0xff] %vm56, %v43
  %61 = vst.msk [vmem:[%s1 + $0x20] sm:$0xff] %vm56, %v44
  %62 = vst.msk [vmem:[%s1 + $0x28] sm:$0xff] %vm56, %v45
  %63 = vst.msk [vmem:[%s1 + $0x30] sm:$0xff] %vm56, %v46
  %64 = vst.msk [vmem:[%s1 + $0x38] sm:$0xff] %vm56, %v47
  %65 = vst.msk [vmem:[%s1 + $0x40] sm:$0xff] %vm56, %v48
  %66 = vst.msk [vmem:[%s1 + $0x48] sm:$0xff] %vm56, %v49
  %67 = vst.msk [vmem:[%s1 + $0x50] sm:$0xff] %vm56, %v50
  %68 = vst.msk [vmem:[%s1 + $0x58] sm:$0xff] %vm56, %v51
  %69 = vst.msk [vmem:[%s1 + $0x60] sm:$0xff] %vm56, %v52
  %70 = vst.msk [vmem:[%s1 + $0x68] sm:$0xff] %vm56, %v53
  %71 = vst.msk [vmem:[%s1 + $0x70] sm:$0xff] %vm56, %v54
  %72 = vst.msk [vmem:[%s1 + $0x78] sm:$0xff] %vm56, %v55
  // Predicated region
  $region6: #{tpu_custom_call.1} parent=0 // pred_check
    _
  $region7: #{tpu_custom_call.1} parent=0 // pred_check_branch
    %74 = sbr.rel (0) target = $region9
  $region8: #{tpu_custom_call.1} parent=0 // pred_region
    _
  $region9: #{tpu_custom_call.1} parent=0 // pred_fallthru
    _
  // Predicated region
  $region10: #{tpu_custom_call.1} parent=0 // pred_check
    _
  $region11: #{tpu_custom_call.1} parent=0 // pred_check_branch
    %76 = sbr.rel (0) target = $region13
  $region12: #{tpu_custom_call.1} parent=0 // pred_region
    _
  $region13: #{tpu_custom_call.1} parent=0 // pred_fallthru
    _

</llo_original>
